<compile_context>
chip_gen: v7x
topology: tpu7x:2x2x1
jax: 0.10.0
libtpu: 0.0.40
codegen_flags: <defaults>
</compile_context>

<pallas_src>
import jax
import jax.numpy as jnp
from jax.experimental import pallas as pl
from jax.experimental.pallas import tpu as pltpu


def _round_up(x, m):
    return ((x + m - 1) // m) * m


def _make_social_agg_kernel(g_blocks, tg):
    """Build the kernel body, specialized on the (static) number of table tiles."""

    def kernel(ids_ref, emb_ref, out_ref, acc_ref):
        # ids_ref: VMEM (TN, 1) int32   remapped neighbor ids
        # emb_ref: VMEM (TG, D)         current table tile
        # out_ref: VMEM (TN, D)         output block (resident across the g axis)
        # acc_ref: VMEM (TN, D) f32     accumulator (used only when g_blocks > 1)
        gb = pl.program_id(1)
        tn = out_ref.shape[0]

        # Local ids relative to this table tile; ids outside [0, TG) produce an
        # all-zero one-hot row and therefore contribute nothing.
        local = ids_ref[...] - gb * tg                                     # (TN, 1)
        onehot = jax.lax.broadcasted_iota(jnp.int32, (tn, tg), 1) == local # (TN, TG)
        onehot = onehot.astype(emb_ref.dtype)

        # Bit-exact gather on the MXU: 0/1 coefficients, HIGHEST precision.
        contrib = jnp.dot(onehot, emb_ref[...],
                          preferred_element_type=jnp.float32,
                          precision=jax.lax.Precision.HIGHEST)             # (TN, D) f32

        if g_blocks == 1:
            # Single resident table tile: write the block once, no extra pass.
            out_ref[...] = contrib.astype(out_ref.dtype)
        else:
            @pl.when(gb == 0)
            def _zero():
                acc_ref[...] = jnp.zeros_like(acc_ref)

            acc_ref[...] += contrib

            @pl.when(gb == g_blocks - 1)
            def _store():
                out_ref[...] = acc_ref[...].astype(out_ref.dtype)

    return kernel


def social_aggregator_forward(neighs, mask, g2e_weight, *, tn=2048, tg_max=256):
    """neighs: int32[N] neighbor ids, mask: float32[N], g2e_weight: [G, D]."""
    n = int(neighs.shape[0])
    g, d = int(g2e_weight.shape[0]), int(g2e_weight.shape[1])
    out_dtype = g2e_weight.dtype
    itemsize = jnp.dtype(out_dtype).itemsize

    # ---- fuse the mask: zero row at index G, remap masked / OOB ids to it ----
    ids = jnp.clip(neighs.astype(jnp.int32), 0, g - 1)
    ids = jnp.where(mask > 0, ids, g)

    # ---- tile sizes -----------------------------------------------------------
    tn = int(min(tn, _round_up(n, 8)))           # node rows per block
    n_pad = _round_up(n, tn)
    n_blocks = n_pad // tn
    tg = int(min(tg_max, _round_up(g + 1, 8)))   # table rows per tile
    g_pad = _round_up(g + 1, tg)
    g_blocks = g_pad // tg

    # ---- pad inputs -----------------------------------------------------------
    ids_p = jnp.pad(ids, (0, n_pad - n), constant_values=g)[:, None]     # (N_pad, 1)
    emb_p = jnp.pad(g2e_weight, ((0, g_pad - g), (0, 0)))                # (G_pad, D); rows >= G are zero

    # ---- VMEM budget (double-buffered blocks + temporaries), capacity-gated ---
    vmem_need = (
        2 * tg * d * itemsize            # table tile, double-buffered
        + 2 * tn * 128 * 4               # ids block (lane-padded), double-buffered
        + 2 * tn * d * itemsize          # output block, double-buffered
        + tn * d * 4                     # accumulator scratch
        + 4 * tn * max(tg, 128) * 4      # one-hot / iota / compare temporaries
        + (8 << 20)                      # headroom
    )
    try:
        vmem_cap = int(pltpu.get_tpu_info().vmem_capacity_bytes)
    except Exception:
        vmem_cap = 64 << 20              # conservative default (v7x per-TC capacity)
    vmem_limit = int(min(max(vmem_need, 32 << 20), max(vmem_cap - (4 << 20), 16 << 20)))

    out = pl.pallas_call(
        _make_social_agg_kernel(g_blocks, tg),
        out_shape=jax.ShapeDtypeStruct((n_pad, d), out_dtype),
        grid=(n_blocks, g_blocks),
        in_specs=[
            pl.BlockSpec((tn, 1), lambda nb, gb: (nb, 0)),   # neighbor ids (VMEM)
            pl.BlockSpec((tg, d), lambda nb, gb: (gb, 0)),   # table tile
        ],
        out_specs=pl.BlockSpec((tn, d), lambda nb, gb: (nb, 0)),
        scratch_shapes=[pltpu.VMEM((tn, d), jnp.float32)],
        compiler_params=pltpu.CompilerParams(
            dimension_semantics=("parallel", "arbitrary"),
            vmem_limit_bytes=vmem_limit,
        ),
    )(ids_p, emb_p)
    # TODO(synk): lane-dense (N*D/128, 128) output writeback (D=32 < 128 means
    # masked vst) skipped: the in-kernel (TN, D)->(TN*D/128, 128) relayout is a
    # Mosaic reshape risk; revisit if the kernel measures writeback-bound.
    return out[:n]


def preprocess_to_neighs(to_neighs):
    # Host-side glue mirroring `pd.DataFrame(to_neighs).fillna(0).values.flatten()`
    # plus the per-node mask, for neighbor lists of length <= 1 (the only case in
    # which the original broadcast `to_feats *= mask.unsqueeze(-1)` is well-formed).
    # TODO(synk): ragged pandas padding for width > 1 has no clean in-kernel equivalent.
    neighs = [int(nb[0]) if len(nb) > 0 else 0 for nb in to_neighs]
    mask = [1.0 if len(nb) > 0 else 0.0 for nb in to_neighs]
    return jnp.asarray(neighs, jnp.int32), jnp.asarray(mask, jnp.float32)


if __name__ == "__main__":
    num_groups = 64      # g2e embedding table size
    embed_dim = 32
    num_nodes = 8

    key = jax.random.PRNGKey(0)
    kw, kn = jax.random.split(key)

    # Deterministic parameter init (nn.Embedding default ~ N(0, 1)).
    g2e_weight = jax.random.normal(kw, (num_groups, embed_dim), dtype=jnp.float32)

    # Deterministic `to_neighs`: some nodes have one social neighbor, some none.
    neigh_ids = jax.random.randint(kn, (num_nodes,), 0, num_groups)
    to_neighs = [[int(neigh_ids[i])] if i % 3 != 0 else [] for i in range(num_nodes)]

    neighs, mask = preprocess_to_neighs(to_neighs)

    out = social_aggregator_forward(neighs, mask, g2e_weight)
    out = jax.block_until_ready(out)

    # Pure-JAX reference check of the forward semantics.
    ref = g2e_weight[neighs] * mask[:, None]
    assert out.shape == (num_nodes, embed_dim)
    assert jnp.allclose(out, ref, atol=1e-6), "kernel output mismatch vs reference"

    print("KERNEL_OK")
</pallas_src>

<mosaic_0001>
module attributes {stable_mosaic.version = 11 : i64} {
  func.func @kernel(%arg0: i32, %arg1: i32, %arg2: memref<8x1xi32, #tpu.memory_space<vmem>>, %arg3: memref<72x32xf32, #tpu.memory_space<vmem>>, %arg4: memref<8x32xf32, #tpu.memory_space<vmem>>, %arg5: memref<8x32xf32, #tpu.memory_space<vmem>>) attributes {dimension_semantics = [#tpu.dimension_semantics<parallel>, #tpu.dimension_semantics<arbitrary>], iteration_bounds = array<i64: 1, 1>, scalar_prefetch = 0 : i64, scratch_operands = 1 : i64, tpu.core_type = #tpu.core_type<tc>, window_params = [{transform_indices = @transform_0, window_bounds = array<i64: 8, 1>}, {transform_indices = @transform_1, window_bounds = array<i64: 72, 32>}, {transform_indices = @transform_2, window_bounds = array<i64: 8, 32>}]} {
    %c0 = arith.constant 0 : index
    %c0_0 = arith.constant 0 : index
    %0 = vector.load %arg2[%c0, %c0_0] : memref<8x1xi32, #tpu.memory_space<vmem>>, vector<8x1xi32>
    %c72_i32 = arith.constant 72 : i32
    %1 = arith.muli %arg1, %c72_i32 : i32
    %2 = vector.broadcast %1 : i32 to vector<8x1xi32>
    %3 = arith.subi %0, %2 : vector<8x1xi32>
    %4 = tpu.iota {dimensions = array<i32: 1>} : vector<8x72xi32>
    %5 = vector.broadcast %3 : vector<8x1xi32> to vector<8x72xi32>
    %6 = arith.cmpi eq, %4, %5 : vector<8x72xi32>
    %7 = arith.extui %6 : vector<8x72xi1> to vector<8x72xi32>
    %8 = arith.sitofp %7 : vector<8x72xi32> to vector<8x72xf32>
    %c0_1 = arith.constant 0 : index
    %c0_2 = arith.constant 0 : index
    %9 = vector.load %arg3[%c0_1, %c0_2] : memref<72x32xf32, #tpu.memory_space<vmem>>, vector<72x32xf32>
    %cst = arith.constant dense<0.000000e+00> : vector<8x32xf32>
    %10 = tpu.matmul %8, %9, %cst {dimension_numbers = #tpu.dot_dimension_numbers<[1], [0], [0], [1], [0, 0, 1, 1], [], []>, precision = #tpu.contract_precision<fp32>} : vector<8x72xf32>, vector<72x32xf32>, vector<8x32xf32> -> vector<8x32xf32>
    %c0_3 = arith.constant 0 : index
    %c0_4 = arith.constant 0 : index
    %11 = vector.load %arg4[%c0_3, %c0_4] : memref<8x32xf32, #tpu.memory_space<vmem>>, vector<8x32xf32>
    tpu.vector_store %arg4[%c0_3, %c0_4], %10 {strides = array<i32>} : memref<8x32xf32, #tpu.memory_space<vmem>>, vector<8x32xf32>,
    return
  }
  func.func @transform_0(%arg0: i32, %arg1: i32) -> (i32, i32) {
    %c0_i32 = arith.constant 0 : i32
    %c0_i32_0 = arith.constant 0 : i32
    return %arg0, %c0_i32 : i32, i32
  }
  func.func @transform_1(%arg0: i32, %arg1: i32) -> (i32, i32) {
    %c0_i32 = arith.constant 0 : i32
    %c0_i32_0 = arith.constant 0 : i32
    return %arg1, %c0_i32 : i32, i32
  }
  func.func @transform_2(%arg0: i32, %arg1: i32) -> (i32, i32) {
    %c0_i32 = arith.constant 0 : i32
    %c0_i32_0 = arith.constant 0 : i32
    return %arg0, %c0_i32 : i32, i32
  }
}

</mosaic_0001>

<llo_original>
// kernel: tpu_custom_call.1
$region0: #{tpu_custom_call.1}
  #allocation0 [shape = 'u32[]', space=smem, size = 0x4, offset = 0x4, fixed_abs, tag = 'smem constant byte address 0x4 - core index']
  #allocation1 [shape = 'u32[144,128]{1,0:T(1,128)}', space=vmem, size = 0x12000, scoped, tag = 'internal scratch']
  #allocation2 [shape = 'f32[8,32]{1,0:T(8,128)}', space=vmem, size = 0x1000, scoped, tag = 'scratch operand']
  %s0 = inlined_call_operand.vmem [shape: s32[8,1], index: 0, kind: input, shape index: {}]
  %s1 = inlined_call_operand.vmem [shape: f32[72,32], index: 1, kind: input, shape index: {}]
  %s2 = inlined_call_operand.hbm [shape: f32[8,32], index: 2, kind: output, shape index: {}]
  %s3 = sld [smem:[#allocation0]]
  $region18: #{tpu_custom_call.1} parent=0
    _
  %s5 = ssub.s32 1, %s3
  %s6 = scalar_select 0, %s5, %s3
  $region1: #{tpu_custom_call.1} parent=0
    #allocation3 [shape = 'u8[4096]{0}', space=vmem, size = 0x1000, scoped, tag = 'output window, operand 0, single buffered']
    #allocation4 [shape = 's32[1]{0}', space=sflag, size = 0x4, scoped, tag = 'scoped memory for tpu_custom_call.1']
    %7 = vsyncpa [#allocation4], 0
    // Predicated region
    $region2: #{tpu_custom_call.1} parent=1 // pred_check
      _
    $region3: #{tpu_custom_call.1} parent=1 // pred_check_branch
      %9 = sbr.rel (0) target = $region5
    $region4: #{tpu_custom_call.1} parent=1 // pred_region
      _
    $region5: #{tpu_custom_call.1} parent=1 // pred_fallthru
      _
    // Predicated region
    $region6: #{tpu_custom_call.1} parent=1 // pred_check
      _
    $region7: #{tpu_custom_call.1} parent=1 // pred_check_branch
      %11 = sbr.rel (0) target = $region9
    $region8: #{tpu_custom_call.1} parent=1 // pred_region
      _
    $region9: #{tpu_custom_call.1} parent=1 // pred_fallthru
      _
    %v12 = vld [vmem:[%s0] sm:$0xff]
    %s13 = smul.u32 0, 72
    %v14 = vstv %s13
    %v15 = vsub.s32 %v12, %v14
    %v16 = vlaneseq
    %v17 = vand.u32 %v16, 127
    %18 = vset.pattern.permute.xlu0 0
    %19 = vperm.xlu0 %18, %v15
    %v20 = vpop.permute.xlu0 %19
    %vm21 = vcmp.eq.s32.totalorder %v17, %v20
    %v22 = vsel %vm21, 1, 0
    %v23 = vcvt.s32.f32 %v22
    %v24 = vld [vmem:[%s1] sm:$0xff]
    %v25 = vld [vmem:[%s1 + $0x8] sm:$0xff]
    %v26 = vld [vmem:[%s1 + $0x10] sm:$0xff]
    %v27 = vld [vmem:[%s1 + $0x18] sm:$0xff]
    %v28 = vld [vmem:[%s1 + $0x20] sm:$0xff]
    %v29 = vld [vmem:[%s1 + $0x28] sm:$0xff]
    %v30 = vld [vmem:[%s1 + $0x30] sm:$0xff]
    %v31 = vld [vmem:[%s1 + $0x38] sm:$0xff]
    %v32 = vld [vmem:[%s1 + $0x40] sm:$0xff]
    %vm33 = vcmask 588800
    %v35 = vsel %vm33, %v23, 0
    %37 = vmatprep.subr.mxu0 0.0
    %v38 = vand.u32 %v24, 4294901760
    %39 = vmatpush1.msra.mxu0 %v38
    %40 = vmatprep.subr.mxu0 0.0
    %v41 = vand.u32 %v25, 4294901760
    %42 = vmatpush1.msra.mxu0 %v41
    %43 = vmatprep.subr.mxu0 0.0
    %v44 = vand.u32 %v26, 4294901760
    %45 = vmatpush1.msra.mxu0 %v44
    %46 = vmatprep.subr.mxu0 0.0
    %v47 = vand.u32 %v27, 4294901760
    %48 = vmatpush1.msra.mxu0 %v47
    %49 = vmatprep.subr.mxu0 0.0
    %v50 = vand.u32 %v28, 4294901760
    %51 = vmatpush1.msra.mxu0 %v50
    %52 = vmatprep.subr.mxu0 0.0
    %v53 = vand.u32 %v29, 4294901760
    %54 = vmatpush1.msra.mxu0 %v53
    %55 = vmatprep.subr.mxu0 0.0
    %v56 = vand.u32 %v30, 4294901760
    %57 = vmatpush1.msra.mxu0 %v56
    %58 = vmatprep.subr.mxu0 0.0
    %v59 = vand.u32 %v31, 4294901760
    %60 = vmatpush1.msra.mxu0 %v59
    %61 = vmatprep.subr.mxu0 0.0
    %v62 = vand.u32 %v32, 4294901760
    %63 = vmatpush1.msra.mxu0 %v62
    %64 = vmatprep.subr.mxu0 0.0
    %65 = vmatpush1.msra.mxu0 0.0
    %66 = vmatprep.subr.mxu0 0.0
    %67 = vmatpush1.msra.mxu0 0.0
    %68 = vmatprep.subr.mxu0 0.0
    %69 = vmatpush1.msra.mxu0 0.0
    %70 = vmatprep.subr.mxu0 0.0
    %71 = vmatpush1.msra.mxu0 0.0
    %72 = vmatprep.subr.mxu0 0.0
    %73 = vmatpush1.msra.mxu0 0.0
    %74 = vmatprep.subr.mxu0 0.0
    %75 = vmatpush1.msra.mxu0 0.0
    %76 = vmatprep.subr.mxu0 0.0
    %77 = vmatpush1.msra.mxu0 0.0
    %78 = vmatprep.subr.mxu0 0.0
    %79 = vmatpush1.msra.mxu0 0.0
    %80 = vmatprep.subr.mxu0 0.0
    %81 = vmatpush1.msra.mxu0 0.0
    %82 = vmatprep.subr.mxu0 0.0
    %83 = vmatpush1.msra.mxu0 0.0
    %84 = vmatprep.subr.mxu0 0.0
    %85 = vmatpush1.msra.mxu0 0.0
    %86 = vmatprep.subr.mxu0 0.0
    %87 = vmatpush1.msra.mxu0 0.0
    %88 = vmatprep.subr.mxu0 0.0
    %89 = vmatpush1.msra.mxu0 0.0
    %90 = vmatprep.subr.mxu0 0.0
    %91 = vmatpush1.msra.mxu0 0.0
    %92 = vmatprep.subr.mxu0 0.0
    %93 = vmatpush1.msra.mxu0 0.0
    %94 = vmatprep.subr.mxu0 0.0
    %95 = vmatpush1.msra.mxu0 0.0
    %96 = vmatprep.subr.mxu0 0.0
    %97 = vmatpush1.msra.mxu0 0.0
    %98 = vmatprep.subr.mxu0 0.0
    %99 = vmatpush1.msra.mxu0 0.0
    %100 = vmatprep.subr.mxu0 0.0
    %101 = vmatpush1.msra.mxu0 0.0
    %102 = vmatprep.subr.mxu0 0.0
    %103 = vmatpush1.msra.mxu0 0.0
    %104 = vmatprep.subr.mxu0 0.0
    %105 = vmatpush1.msra.mxu0 0.0
    %106 = vmatprep.subr.mxu0 0.0
    %107 = vmatpush1.msra.mxu0 0.0
    %108 = vmatprep.subr.mxu0 0.0
    %109 = vmatpush1.msra.mxu0 0.0
    %110 = vmatprep.mubr.f32.mxu0 0.0
    %v111 = vand.u32 %v35, 4294901760
    %v112 = vsub.f32 %v35, %v111
    %v113 = vand.u32 %v112, 4294901760
    %v114 = vsub.f32 %v112, %v113
    %v115 = vand.u32 %v114, 4294901760
    %116 = vmatmul.mubr.f32.gmra.mrb[0].mxu0 %v115
    %v117 = vpop.f32.mrb[0].mxu0
    %v118 = vadd.f32 0.0, %v117
    %v119 = vpop.f32.mrb[0].mxu0
    %120 = vdwg.mxu0
    %121 = vmatprep.subr.mxu0 0.0
    %v122 = vand.u32 %v24, 4294901760
    %v123 = vsub.f32 %v24, %v122
    %v124 = vand.u32 %v123, 4294901760
    %v125 = vsub.f32 %v123, %v124
    %v126 = vand.u32 %v125, 4294901760
    %127 = vmatpush1.msra.mxu0 %v126
    %128 = vmatprep.subr.mxu0 0.0
    %v129 = vand.u32 %v25, 4294901760
    %v130 = vsub.f32 %v25, %v129
    %v131 = vand.u32 %v130, 4294901760
    %v132 = vsub.f32 %v130, %v131
    %v133 = vand.u32 %v132, 4294901760
    %134 = vmatpush1.msra.mxu0 %v133
    %135 = vmatprep.subr.mxu0 0.0
    %v136 = vand.u32 %v26, 4294901760
    %v137 = vsub.f32 %v26, %v136
    %v138 = vand.u32 %v137, 4294901760
    %v139 = vsub.f32 %v137, %v138
    %v140 = vand.u32 %v139, 4294901760
    %141 = vmatpush1.msra.mxu0 %v140
    %142 = vmatprep.subr.mxu0 0.0
    %v143 = vand.u32 %v27, 4294901760
    %v144 = vsub.f32 %v27, %v143
    %v145 = vand.u32 %v144, 4294901760
    %v146 = vsub.f32 %v144, %v145
    %v147 = vand.u32 %v146, 4294901760
    %148 = vmatpush1.msra.mxu0 %v147
    %149 = vmatprep.subr.mxu0 0.0
    %v150 = vand.u32 %v28, 4294901760
    %v151 = vsub.f32 %v28, %v150
    %v152 = vand.u32 %v151, 4294901760
    %v153 = vsub.f32 %v151, %v152
    %v154 = vand.u32 %v153, 4294901760
    %155 = vmatpush1.msra.mxu0 %v154
    %156 = vmatprep.subr.mxu0 0.0
    %v157 = vand.u32 %v29, 4294901760
    %v158 = vsub.f32 %v29, %v157
    %v159 = vand.u32 %v158, 4294901760
    %v160 = vsub.f32 %v158, %v159
    %v161 = vand.u32 %v160, 4294901760
    %162 = vmatpush1.msra.mxu0 %v161
    %163 = vmatprep.subr.mxu0 0.0
    %v164 = vand.u32 %v30, 4294901760
    %v165 = vsub.f32 %v30, %v164
    %v166 = vand.u32 %v165, 4294901760
    %v167 = vsub.f32 %v165, %v166
    %v168 = vand.u32 %v167, 4294901760
    %169 = vmatpush1.msra.mxu0 %v168
    %170 = vmatprep.subr.mxu0 0.0
    %v171 = vand.u32 %v31, 4294901760
    %v172 = vsub.f32 %v31, %v171
    %v173 = vand.u32 %v172, 4294901760
    %v174 = vsub.f32 %v172, %v173
    %v175 = vand.u32 %v174, 4294901760
    %176 = vmatpush1.msra.mxu0 %v175
    %177 = vmatprep.subr.mxu0 0.0
    %v178 = vand.u32 %v32, 4294901760
    %v179 = vsub.f32 %v32, %v178
    %v180 = vand.u32 %v179, 4294901760
    %v181 = vsub.f32 %v179, %v180
    %v182 = vand.u32 %v181, 4294901760
    %183 = vmatpush1.msra.mxu0 %v182
    %184 = vmatprep.subr.mxu0 0.0
    %185 = vmatpush1.msra.mxu0 0.0
    %186 = vmatprep.subr.mxu0 0.0
    %187 = vmatpush1.msra.mxu0 0.0
    %188 = vmatprep.subr.mxu0 0.0
    %189 = vmatpush1.msra.mxu0 0.0
    %190 = vmatprep.subr.mxu0 0.0
    %191 = vmatpush1.msra.mxu0 0.0
    %192 = vmatprep.subr.mxu0 0.0
    %193 = vmatpush1.msra.mxu0 0.0
    %194 = vmatprep.subr.mxu0 0.0
    %195 = vmatpush1.msra.mxu0 0.0
    %196 = vmatprep.subr.mxu0 0.0
    %197 = vmatpush1.msra.mxu0 0.0
    %198 = vmatprep.subr.mxu0 0.0
    %199 = vmatpush1.msra.mxu0 0.0
    %200 = vmatprep.subr.mxu0 0.0
    %201 = vmatpush1.msra.mxu0 0.0
    %202 = vmatprep.subr.mxu0 0.0
    %203 = vmatpush1.msra.mxu0 0.0
    %204 = vmatprep.subr.mxu0 0.0
    %205 = vmatpush1.msra.mxu0 0.0
    %206 = vmatprep.subr.mxu0 0.0
    %207 = vmatpush1.msra.mxu0 0.0
    %208 = vmatprep.subr.mxu0 0.0
    %209 = vmatpush1.msra.mxu0 0.0
    %210 = vmatprep.subr.mxu0 0.0
    %211 = vmatpush1.msra.mxu0 0.0
    %212 = vmatprep.subr.mxu0 0.0
    %213 = vmatpush1.msra.mxu0 0.0
    %214 = vmatprep.subr.mxu0 0.0
    %215 = vmatpush1.msra.mxu0 0.0
    %216 = vmatprep.subr.mxu0 0.0
    %217 = vmatpush1.msra.mxu0 0.0
    %218 = vmatprep.subr.mxu0 0.0
    %219 = vmatpush1.msra.mxu0 0.0
    %220 = vmatprep.subr.mxu0 0.0
    %221 = vmatpush1.msra.mxu0 0.0
    %222 = vmatprep.subr.mxu0 0.0
    %223 = vmatpush1.msra.mxu0 0.0
    %224 = vmatprep.subr.mxu0 0.0
    %225 = vmatpush1.msra.mxu0 0.0
    %226 = vmatprep.subr.mxu0 0.0
    %227 = vmatpush1.msra.mxu0 0.0
    %228 = vmatprep.subr.mxu0 0.0
    %229 = vmatpush1.msra.mxu0 0.0
    %230 = vmatprep.mubr.f32.mxu0 0.0
    %v231 = vand.u32 %v35, 4294901760
    %232 = vmatmul.mubr.f32.gmra.mrb[0].mxu0 %v231
    %v233 = vpop.f32.mrb[0].mxu0
    %v234 = vadd.f32 %v118, %v233
    %v235 = vpop.f32.mrb[0].mxu0
    %236 = vdwg.mxu0
    %237 = vmatprep.subr.mxu0 0.0
    %v238 = vand.u32 %v24, 4294901760
    %v239 = vsub.f32 %v24, %v238
    %240 = vmatpush1.msra.mxu0 %v239
    %241 = vmatprep.subr.mxu0 0.0
    %v242 = vand.u32 %v25, 4294901760
    %v243 = vsub.f32 %v25, %v242
    %244 = vmatpush1.msra.mxu0 %v243
    %245 = vmatprep.subr.mxu0 0.0
    %v246 = vand.u32 %v26, 4294901760
    %v247 = vsub.f32 %v26, %v246
    %248 = vmatpush1.msra.mxu0 %v247
    %249 = vmatprep.subr.mxu0 0.0
    %v250 = vand.u32 %v27, 4294901760
    %v251 = vsub.f32 %v27, %v250
    %252 = vmatpush1.msra.mxu0 %v251
    %253 = vmatprep.subr.mxu0 0.0
    %v254 = vand.u32 %v28, 4294901760
    %v255 = vsub.f32 %v28, %v254
    %256 = vmatpush1.msra.mxu0 %v255
    %257 = vmatprep.subr.mxu0 0.0
    %v258 = vand.u32 %v29, 4294901760
    %v259 = vsub.f32 %v29, %v258
    %260 = vmatpush1.msra.mxu0 %v259
    %261 = vmatprep.subr.mxu0 0.0
    %v262 = vand.u32 %v30, 4294901760
    %v263 = vsub.f32 %v30, %v262
    %264 = vmatpush1.msra.mxu0 %v263
    %265 = vmatprep.subr.mxu0 0.0
    %v266 = vand.u32 %v31, 4294901760
    %v267 = vsub.f32 %v31, %v266
    %268 = vmatpush1.msra.mxu0 %v267
    %269 = vmatprep.subr.mxu0 0.0
    %v270 = vand.u32 %v32, 4294901760
    %v271 = vsub.f32 %v32, %v270
    %272 = vmatpush1.msra.mxu0 %v271
    %273 = vmatprep.subr.mxu0 0.0
    %274 = vmatpush1.msra.mxu0 0.0
    %275 = vmatprep.subr.mxu0 0.0
    %276 = vmatpush1.msra.mxu0 0.0
    %277 = vmatprep.subr.mxu0 0.0
    %278 = vmatpush1.msra.mxu0 0.0
    %279 = vmatprep.subr.mxu0 0.0
    %280 = vmatpush1.msra.mxu0 0.0
    %281 = vmatprep.subr.mxu0 0.0
    %282 = vmatpush1.msra.mxu0 0.0
    %283 = vmatprep.subr.mxu0 0.0
    %284 = vmatpush1.msra.mxu0 0.0
    %285 = vmatprep.subr.mxu0 0.0
    %286 = vmatpush1.msra.mxu0 0.0
    %287 = vmatprep.subr.mxu0 0.0
    %288 = vmatpush1.msra.mxu0 0.0
    %289 = vmatprep.subr.mxu0 0.0
    %290 = vmatpush1.msra.mxu0 0.0
    %291 = vmatprep.subr.mxu0 0.0
    %292 = vmatpush1.msra.mxu0 0.0
    %293 = vmatprep.subr.mxu0 0.0
    %294 = vmatpush1.msra.mxu0 0.0
    %295 = vmatprep.subr.mxu0 0.0
    %296 = vmatpush1.msra.mxu0 0.0
    %297 = vmatprep.subr.mxu0 0.0
    %298 = vmatpush1.msra.mxu0 0.0
    %299 = vmatprep.subr.mxu0 0.0
    %300 = vmatpush1.msra.mxu0 0.0
    %301 = vmatprep.subr.mxu0 0.0
    %302 = vmatpush1.msra.mxu0 0.0
    %303 = vmatprep.subr.mxu0 0.0
    %304 = vmatpush1.msra.mxu0 0.0
    %305 = vmatprep.subr.mxu0 0.0
    %306 = vmatpush1.msra.mxu0 0.0
    %307 = vmatprep.subr.mxu0 0.0
    %308 = vmatpush1.msra.mxu0 0.0
    %309 = vmatprep.subr.mxu0 0.0
    %310 = vmatpush1.msra.mxu0 0.0
    %311 = vmatprep.subr.mxu0 0.0
    %312 = vmatpush1.msra.mxu0 0.0
    %313 = vmatprep.subr.mxu0 0.0
    %314 = vmatpush1.msra.mxu0 0.0
    %315 = vmatprep.subr.mxu0 0.0
    %316 = vmatpush1.msra.mxu0 0.0
    %317 = vmatprep.subr.mxu0 0.0
    %318 = vmatpush1.msra.mxu0 0.0
    %319 = vmatprep.mubr.f32.mxu0 0.0
    %v320 = vand.u32 %v35, 4294901760
    %v321 = vsub.f32 %v35, %v320
    %322 = vmatmul.mubr.f32.gmra.mrb[0].mxu0 %v321
    %v323 = vpop.f32.mrb[0].mxu0
    %v324 = vadd.f32 %v234, %v323
    %v325 = vpop.f32.mrb[0].mxu0
    %326 = vdwg.mxu0
    %327 = vmatprep.subr.mxu0 0.0
    %v328 = vand.u32 %v24, 4294901760
    %329 = vmatpush1.msra.mxu0 %v328
    %330 = vmatprep.subr.mxu0 0.0
    %v331 = vand.u32 %v25, 4294901760
    %332 = vmatpush1.msra.mxu0 %v331
    %333 = vmatprep.subr.mxu0 0.0
    %v334 = vand.u32 %v26, 4294901760
    %335 = vmatpush1.msra.mxu0 %v334
    %336 = vmatprep.subr.mxu0 0.0
    %v337 = vand.u32 %v27, 4294901760
    %338 = vmatpush1.msra.mxu0 %v337
    %339 = vmatprep.subr.mxu0 0.0
    %v340 = vand.u32 %v28, 4294901760
    %341 = vmatpush1.msra.mxu0 %v340
    %342 = vmatprep.subr.mxu0 0.0
    %v343 = vand.u32 %v29, 4294901760
    %344 = vmatpush1.msra.mxu0 %v343
    %345 = vmatprep.subr.mxu0 0.0
    %v346 = vand.u32 %v30, 4294901760
    %347 = vmatpush1.msra.mxu0 %v346
    %348 = vmatprep.subr.mxu0 0.0
    %v349 = vand.u32 %v31, 4294901760
    %350 = vmatpush1.msra.mxu0 %v349
    %351 = vmatprep.subr.mxu0 0.0
    %v352 = vand.u32 %v32, 4294901760
    %353 = vmatpush1.msra.mxu0 %v352
    %354 = vmatprep.subr.mxu0 0.0
    %355 = vmatpush1.msra.mxu0 0.0
    %356 = vmatprep.subr.mxu0 0.0
    %357 = vmatpush1.msra.mxu0 0.0
    %358 = vmatprep.subr.mxu0 0.0
    %359 = vmatpush1.msra.mxu0 0.0
    %360 = vmatprep.subr.mxu0 0.0
    %361 = vmatpush1.msra.mxu0 0.0
    %362 = vmatprep.subr.mxu0 0.0
    %363 = vmatpush1.msra.mxu0 0.0
    %364 = vmatprep.subr.mxu0 0.0
    %365 = vmatpush1.msra.mxu0 0.0
    %366 = vmatprep.subr.mxu0 0.0
    %367 = vmatpush1.msra.mxu0 0.0
    %368 = vmatprep.subr.mxu0 0.0
    %369 = vmatpush1.msra.mxu0 0.0
    %370 = vmatprep.subr.mxu0 0.0
    %371 = vmatpush1.msra.mxu0 0.0
    %372 = vmatprep.subr.mxu0 0.0
    %373 = vmatpush1.msra.mxu0 0.0
    %374 = vmatprep.subr.mxu0 0.0
    %375 = vmatpush1.msra.mxu0 0.0
    %376 = vmatprep.subr.mxu0 0.0
    %377 = vmatpush1.msra.mxu0 0.0
    %378 = vmatprep.subr.mxu0 0.0
    %379 = vmatpush1.msra.mxu0 0.0
    %380 = vmatprep.subr.mxu0 0.0
    %381 = vmatpush1.msra.mxu0 0.0
    %382 = vmatprep.subr.mxu0 0.0
    %383 = vmatpush1.msra.mxu0 0.0
    %384 = vmatprep.subr.mxu0 0.0
    %385 = vmatpush1.msra.mxu0 0.0
    %386 = vmatprep.subr.mxu0 0.0
    %387 = vmatpush1.msra.mxu0 0.0
    %388 = vmatprep.subr.mxu0 0.0
    %389 = vmatpush1.msra.mxu0 0.0
    %390 = vmatprep.subr.mxu0 0.0
    %391 = vmatpush1.msra.mxu0 0.0
    %392 = vmatprep.subr.mxu0 0.0
    %393 = vmatpush1.msra.mxu0 0.0
    %394 = vmatprep.subr.mxu0 0.0
    %395 = vmatpush1.msra.mxu0 0.0
    %396 = vmatprep.subr.mxu0 0.0
    %397 = vmatpush1.msra.mxu0 0.0
    %398 = vmatprep.subr.mxu0 0.0
    %399 = vmatpush1.msra.mxu0 0.0
    %400 = vmatprep.mubr.f32.mxu0 0.0
    %v401 = vand.u32 %v35, 4294901760
    %v402 = vsub.f32 %v35, %v401
    %v403 = vand.u32 %v402, 4294901760
    %404 = vmatmul.mubr.f32.gmra.mrb[0].mxu0 %v403
    %v405 = vpop.f32.mrb[0].mxu0
    %v406 = vadd.f32 %v324, %v405
    %v407 = vpop.f32.mrb[0].mxu0
    %408 = vdwg.mxu0
    %409 = vmatprep.subr.mxu0 0.0
    %v410 = vand.u32 %v24, 4294901760
    %v411 = vsub.f32 %v24, %v410
    %v412 = vand.u32 %v411, 4294901760
    %413 = vmatpush1.msra.mxu0 %v412
    %414 = vmatprep.subr.mxu0 0.0
    %v415 = vand.u32 %v25, 4294901760
    %v416 = vsub.f32 %v25, %v415
    %v417 = vand.u32 %v416, 4294901760
    %418 = vmatpush1.msra.mxu0 %v417
    %419 = vmatprep.subr.mxu0 0.0
    %v420 = vand.u32 %v26, 4294901760
    %v421 = vsub.f32 %v26, %v420
    %v422 = vand.u32 %v421, 4294901760
    %423 = vmatpush1.msra.mxu0 %v422
    %424 = vmatprep.subr.mxu0 0.0
    %v425 = vand.u32 %v27, 4294901760
    %v426 = vsub.f32 %v27, %v425
    %v427 = vand.u32 %v426, 4294901760
    %428 = vmatpush1.msra.mxu0 %v427
    %429 = vmatprep.subr.mxu0 0.0
    %v430 = vand.u32 %v28, 4294901760
    %v431 = vsub.f32 %v28, %v430
    %v432 = vand.u32 %v431, 4294901760
    %433 = vmatpush1.msra.mxu0 %v432
    %434 = vmatprep.subr.mxu0 0.0
    %v435 = vand.u32 %v29, 4294901760
    %v436 = vsub.f32 %v29, %v435
    %v437 = vand.u32 %v436, 4294901760
    %438 = vmatpush1.msra.mxu0 %v437
    %439 = vmatprep.subr.mxu0 0.0
    %v440 = vand.u32 %v30, 4294901760
    %v441 = vsub.f32 %v30, %v440
    %v442 = vand.u32 %v441, 4294901760
    %443 = vmatpush1.msra.mxu0 %v442
    %444 = vmatprep.subr.mxu0 0.0
    %v445 = vand.u32 %v31, 4294901760
    %v446 = vsub.f32 %v31, %v445
    %v447 = vand.u32 %v446, 4294901760
    %448 = vmatpush1.msra.mxu0 %v447
    %449 = vmatprep.subr.mxu0 0.0
    %v450 = vand.u32 %v32, 4294901760
    %v451 = vsub.f32 %v32, %v450
    %v452 = vand.u32 %v451, 4294901760
    %453 = vmatpush1.msra.mxu0 %v452
    %454 = vmatprep.subr.mxu0 0.0
    %455 = vmatpush1.msra.mxu0 0.0
    %456 = vmatprep.subr.mxu0 0.0
    %457 = vmatpush1.msra.mxu0 0.0
    %458 = vmatprep.subr.mxu0 0.0
    %459 = vmatpush1.msra.mxu0 0.0
    %460 = vmatprep.subr.mxu0 0.0
    %461 = vmatpush1.msra.mxu0 0.0
    %462 = vmatprep.subr.mxu0 0.0
    %463 = vmatpush1.msra.mxu0 0.0
    %464 = vmatprep.subr.mxu0 0.0
    %465 = vmatpush1.msra.mxu0 0.0
    %466 = vmatprep.subr.mxu0 0.0
    %467 = vmatpush1.msra.mxu0 0.0
    %468 = vmatprep.subr.mxu0 0.0
    %469 = vmatpush1.msra.mxu0 0.0
    %470 = vmatprep.subr.mxu0 0.0
    %471 = vmatpush1.msra.mxu0 0.0
    %472 = vmatprep.subr.mxu0 0.0
    %473 = vmatpush1.msra.mxu0 0.0
    %474 = vmatprep.subr.mxu0 0.0
    %475 = vmatpush1.msra.mxu0 0.0
    %476 = vmatprep.subr.mxu0 0.0
    %477 = vmatpush1.msra.mxu0 0.0
    %478 = vmatprep.subr.mxu0 0.0
    %479 = vmatpush1.msra.mxu0 0.0
    %480 = vmatprep.subr.mxu0 0.0
    %481 = vmatpush1.msra.mxu0 0.0
    %482 = vmatprep.subr.mxu0 0.0
    %483 = vmatpush1.msra.mxu0 0.0
    %484 = vmatprep.subr.mxu0 0.0
    %485 = vmatpush1.msra.mxu0 0.0
    %486 = vmatprep.subr.mxu0 0.0
    %487 = vmatpush1.msra.mxu0 0.0
    %488 = vmatprep.subr.mxu0 0.0
    %489 = vmatpush1.msra.mxu0 0.0
    %490 = vmatprep.subr.mxu0 0.0
    %491 = vmatpush1.msra.mxu0 0.0
    %492 = vmatprep.subr.mxu0 0.0
    %493 = vmatpush1.msra.mxu0 0.0
    %494 = vmatprep.subr.mxu0 0.0
    %495 = vmatpush1.msra.mxu0 0.0
    %496 = vmatprep.subr.mxu0 0.0
    %497 = vmatpush1.msra.mxu0 0.0
    %498 = vmatprep.subr.mxu0 0.0
    %499 = vmatpush1.msra.mxu0 0.0
    %500 = vmatprep.mubr.f32.mxu0 0.0
    %v501 = vand.u32 %v35, 4294901760
    %502 = vmatmul.mubr.f32.gmra.mrb[0].mxu0 %v501
    %v503 = vpop.f32.mrb[0].mxu0
    %v504 = vadd.f32 %v406, %v503
    %v505 = vpop.f32.mrb[0].mxu0
    %506 = vdwg.mxu0
    %507 = vmatprep.subr.mxu0 0.0
    %v508 = vand.u32 %v24, 4294901760
    %509 = vmatpush1.msra.mxu0 %v508
    %510 = vmatprep.subr.mxu0 0.0
    %v511 = vand.u32 %v25, 4294901760
    %512 = vmatpush1.msra.mxu0 %v511
    %513 = vmatprep.subr.mxu0 0.0
    %v514 = vand.u32 %v26, 4294901760
    %515 = vmatpush1.msra.mxu0 %v514
    %516 = vmatprep.subr.mxu0 0.0
    %v517 = vand.u32 %v27, 4294901760
    %518 = vmatpush1.msra.mxu0 %v517
    %519 = vmatprep.subr.mxu0 0.0
    %v520 = vand.u32 %v28, 4294901760
    %521 = vmatpush1.msra.mxu0 %v520
    %522 = vmatprep.subr.mxu0 0.0
    %v523 = vand.u32 %v29, 4294901760
    %524 = vmatpush1.msra.mxu0 %v523
    %525 = vmatprep.subr.mxu0 0.0
    %v526 = vand.u32 %v30, 4294901760
    %527 = vmatpush1.msra.mxu0 %v526
    %528 = vmatprep.subr.mxu0 0.0
    %v529 = vand.u32 %v31, 4294901760
    %530 = vmatpush1.msra.mxu0 %v529
    %531 = vmatprep.subr.mxu0 0.0
    %v532 = vand.u32 %v32, 4294901760
    %533 = vmatpush1.msra.mxu0 %v532
    %534 = vmatprep.subr.mxu0 0.0
    %535 = vmatpush1.msra.mxu0 0.0
    %536 = vmatprep.subr.mxu0 0.0
    %537 = vmatpush1.msra.mxu0 0.0
    %538 = vmatprep.subr.mxu0 0.0
    %539 = vmatpush1.msra.mxu0 0.0
    %540 = vmatprep.subr.mxu0 0.0
    %541 = vmatpush1.msra.mxu0 0.0
    %542 = vmatprep.subr.mxu0 0.0
    %543 = vmatpush1.msra.mxu0 0.0
    %544 = vmatprep.subr.mxu0 0.0
    %545 = vmatpush1.msra.mxu0 0.0
    %546 = vmatprep.subr.mxu0 0.0
    %547 = vmatpush1.msra.mxu0 0.0
    %548 = vmatprep.subr.mxu0 0.0
    %549 = vmatpush1.msra.mxu0 0.0
    %550 = vmatprep.subr.mxu0 0.0
    %551 = vmatpush1.msra.mxu0 0.0
    %552 = vmatprep.subr.mxu0 0.0
    %553 = vmatpush1.msra.mxu0 0.0
    %554 = vmatprep.subr.mxu0 0.0
    %555 = vmatpush1.msra.mxu0 0.0
    %556 = vmatprep.subr.mxu0 0.0
    %557 = vmatpush1.msra.mxu0 0.0
    %558 = vmatprep.subr.mxu0 0.0
    %559 = vmatpush1.msra.mxu0 0.0
    %560 = vmatprep.subr.mxu0 0.0
    %561 = vmatpush1.msra.mxu0 0.0
    %562 = vmatprep.subr.mxu0 0.0
    %563 = vmatpush1.msra.mxu0 0.0
    %564 = vmatprep.subr.mxu0 0.0
    %565 = vmatpush1.msra.mxu0 0.0
    %566 = vmatprep.subr.mxu0 0.0
    %567 = vmatpush1.msra.mxu0 0.0
    %568 = vmatprep.subr.mxu0 0.0
    %569 = vmatpush1.msra.mxu0 0.0
    %570 = vmatprep.subr.mxu0 0.0
    %571 = vmatpush1.msra.mxu0 0.0
    %572 = vmatprep.subr.mxu0 0.0
    %573 = vmatpush1.msra.mxu0 0.0
    %574 = vmatprep.subr.mxu0 0.0
    %575 = vmatpush1.msra.mxu0 0.0
    %576 = vmatprep.subr.mxu0 0.0
    %577 = vmatpush1.msra.mxu0 0.0
    %578 = vmatprep.subr.mxu0 0.0
    %579 = vmatpush1.msra.mxu0 0.0
    %580 = vmatprep.mubr.f32.mxu0 0.0
    %v581 = vand.u32 %v35, 4294901760
    %582 = vmatmul.mubr.f32.gmra.mrb[0].mxu0 %v581
    %v583 = vpop.f32.mrb[0].mxu0
    %v584 = vadd.f32 %v504, %v583
    %v585 = vpop.f32.mrb[0].mxu0
    %586 = vdwg.mxu0
    %vm587 = vcmask 261120
    %588 = vst.msk [vmem:[#allocation3] sm:$0xff] %vm587, %v584
    // Predicated region
    $region10: #{tpu_custom_call.1} parent=1 // pred_check
      _
    $region11: #{tpu_custom_call.1} parent=1 // pred_check_branch
      %590 = sbr.rel (0) target = $region13
    $region12: #{tpu_custom_call.1} parent=1 // pred_region
      %s592 = ssub.s32 128, 128
      %593 = vsyncadd [#allocation4], %s592
      %s595 = sshll.u32 [#allocation3], 4
      %s596 = int_to_ptr.vmem [resolvable:$true] %s595
      %598 = dma.vmem_to_hbm [thread:$0]  %s596, 128, %s2, [#allocation4]
    $region13: #{tpu_custom_call.1} parent=1 // pred_fallthru
      _
    // Predicated region
    $region14: #{tpu_custom_call.1} parent=1 // pred_check
      _
    $region15: #{tpu_custom_call.1} parent=1 // pred_check_branch
      %600 = sbr.rel (0) target = $region17
    $region16: #{tpu_custom_call.1} parent=1 // pred_region
      %601 = dma.done [#allocation4], 128
    $region17: #{tpu_custom_call.1} parent=1 // pred_fallthru
      _
    %602 = vsyncpa [#allocation4], 1

</llo_original>
